<compile_context>
chip_gen: v7x
topology: tpu7x:2x2x1
jax: 0.10.0
libtpu: 0.0.40
codegen_flags: <defaults>
</compile_context>

<pallas_src>
import math
import functools

import jax
import jax.numpy as jnp
from jax.experimental import pallas as pl
from jax.experimental.pallas import tpu as pltpu


def _round_up(x, m):
    return ((x + m - 1) // m) * m


def _arcface_kernel(hit_ref, emb_ref, w_ref, invn_ref, label_ref, out_ref, *,
                    s, cos_m, sin_m, mm, threshold):
    i = pl.program_id(0)
    j = pl.program_id(1)
    nj = pl.num_programs(1)

    # MXU matmul with f32 accumulation.  invn_ref holds s / ||W_col||_2,
    # computed once in f32 in the wrapper (padded columns hold 0.0, so their
    # logits are exactly 0 and get sliced off).
    acc = jnp.dot(emb_ref[...], w_ref[...], preferred_element_type=jnp.float32)
    logits = jnp.clip(acc * invn_ref[...], -s, s)        # == s * clip(cos, -1, 1)

    # Fast path: no label of this row block lands in this class block.
    out_ref[...] = logits.astype(out_ref.dtype)

    col_base = j * acc.shape[1]

    @pl.when(hit_ref[i * nj + j] > 0)
    def _():
        # Rare path: apply the ArcFace margin to the label columns only.
        cos_theta = logits * (1.0 / s)                   # clip(cos, -1, 1)
        sin_theta = jnp.sqrt(jnp.maximum(1.0 - cos_theta * cos_theta, 0.0))
        cos_theta_m = cos_theta * cos_m - sin_theta * sin_m
        cos_theta_m = jnp.where(cos_theta - threshold <= 0.0,
                                cos_theta - mm, cos_theta_m)
        col_ids = jax.lax.broadcasted_iota(jnp.int32, acc.shape, 1) + col_base
        label_mask = col_ids == label_ref[...]           # (tm, tn) vs (tm, 1)
        out = jnp.where(label_mask, cos_theta_m * s, logits)
        out_ref[...] = out.astype(out_ref.dtype)


def arcface2_forward(embeddings, weight, label, *, s=64.0, m=0.5,
                     tm=1024, tn=512, mxu_dtype=jnp.bfloat16,
                     out_dtype=jnp.float32):
    """ArcFace2.forward(embeddings, label).

    embeddings: (nB, E) float32
    weight:     (E, C)  float32   (the `self.kernel` parameter)
    label:      (nB,)   int       (class index per row)
    returns:    (nB, C) out_dtype (default float32; bf16 halves HBM writes)
    """
    nB, E = embeddings.shape
    E2, C = weight.shape
    assert E == E2

    cos_m = math.cos(m)
    sin_m = math.sin(m)
    mm = sin_m * m
    threshold = math.cos(math.pi - m)

    esz = jnp.dtype(mxu_dtype).itemsize
    osz = jnp.dtype(out_dtype).itemsize

    # ---- tile selection ---------------------------------------------------
    row_align = 16 if esz == 2 else 8
    n_align = 256                          # full 256x256 MXU passes on v6e/v7x
    e_align = 256 if E > 128 else 128
    E_pad = _round_up(E, e_align)

    tm = _round_up(max(row_align, min(tm, _round_up(nB, row_align))), row_align)
    tn = _round_up(max(n_align, min(tn, _round_up(C, n_align))), n_align)

    def vmem_estimate(tm_, tn_):
        blocks = (2 * tm_ * E_pad * esz        # embeddings (double-buffered)
                  + 2 * E_pad * tn_ * esz      # weight
                  + 2 * tm_ * tn_ * osz        # output
                  + 2 * tn_ * 4 + 2 * tm_ * 4)  # inv-norm / labels
        temps = 6 * tm_ * tn_ * 4              # acc/logits + f32 epilogue temps
        return blocks + temps

    budget = 40 * 1024 * 1024                  # stay well under v7x's 64 MiB VMEM
    while vmem_estimate(tm, tn) > budget and tm > row_align:
        tm = max(row_align, _round_up(tm // 2, row_align))
    while vmem_estimate(tm, tn) > budget and tn > n_align:
        tn = max(n_align, _round_up(tn // 2, n_align))

    # Prefer >=2 class-axis blocks so both v7x TensorCores get work even when
    # the whole batch fits a single row block.
    if _round_up(C, tn) == tn and tn > n_align:
        tn = max(n_align, _round_up(tn // 2, n_align))

    nB_pad = _round_up(nB, tm)
    C_pad = _round_up(C, tn)
    num_I = nB_pad // tm
    num_J = C_pad // tn

    # ---- host-side prep (f32 column norms, padding, hit table) -------------
    w_f32 = weight.astype(jnp.float32)
    col_norm = jnp.sqrt(jnp.sum(w_f32 * w_f32, axis=0, keepdims=True))  # (1, C)
    inv_norm_s = s / jnp.maximum(col_norm, 1e-30)
    # Padded classes get 0.0 -> logits exactly 0 (sliced off below).
    invn_p = jnp.pad(inv_norm_s, ((0, 0), (0, C_pad - C)))

    emb_p = jnp.pad(embeddings.astype(jnp.float32),
                    ((0, nB_pad - nB), (0, E_pad - E))).astype(mxu_dtype)
    w_p = jnp.pad(w_f32, ((0, E_pad - E), (0, C_pad - C))).astype(mxu_dtype)

    label_flat = jnp.pad(label.astype(jnp.int32), (0, nB_pad - nB),
                         constant_values=-1)              # padded rows never match
    label_p = label_flat.reshape(nB_pad, 1)

    # Per-(row-block, class-block) flag: does any label land in this tile?
    row_blk = jnp.arange(nB_pad, dtype=jnp.int32) // tm
    col_blk = jnp.where(label_flat >= 0, label_flat // tn, -1)
    row_oh = (row_blk[:, None] == jnp.arange(num_I, dtype=jnp.int32)[None, :])
    col_oh = (col_blk[:, None] == jnp.arange(num_J, dtype=jnp.int32)[None, :])
    hits = (row_oh.astype(jnp.float32).T @ col_oh.astype(jnp.float32)) > 0.5
    hits = hits.astype(jnp.int32).reshape(-1)             # (num_I * num_J,) SMEM

    est = vmem_estimate(tm, tn)
    vmem_limit = None
    if est > 32 * 1024 * 1024:
        vmem_limit = int(min(est * 1.2, 48 * 1024 * 1024))

    kernel = functools.partial(_arcface_kernel, s=s, cos_m=cos_m, sin_m=sin_m,
                               mm=mm, threshold=threshold)

    out_pad = pl.pallas_call(
        kernel,
        out_shape=jax.ShapeDtypeStruct((nB_pad, C_pad), out_dtype),
        grid_spec=pltpu.PrefetchScalarGridSpec(
            num_scalar_prefetch=1,
            grid=(num_I, num_J),
            in_specs=[
                pl.BlockSpec((tm, E_pad), lambda i, j, hit: (i, 0)),  # embeddings
                pl.BlockSpec((E_pad, tn), lambda i, j, hit: (0, j)),  # weight
                pl.BlockSpec((1, tn), lambda i, j, hit: (0, j)),      # s/||W_col||
                pl.BlockSpec((tm, 1), lambda i, j, hit: (i, 0)),      # labels
            ],
            out_specs=pl.BlockSpec((tm, tn), lambda i, j, hit: (i, j)),
        ),
        compiler_params=pltpu.CompilerParams(
            dimension_semantics=("parallel", "parallel"),
            vmem_limit_bytes=vmem_limit),
        cost_estimate=pl.CostEstimate(
            flops=2 * nB_pad * E_pad * C_pad,
            transcendentals=nB_pad * tn,                 # margin path, hit tiles only
            bytes_accessed=(nB_pad * E_pad * esz          # embeddings, read once
                            + num_I * E_pad * C_pad * esz  # W re-read per row block
                            + num_I * C_pad * 4            # inv-norm per row block
                            + num_J * nB_pad * 4           # labels per class block
                            + nB_pad * C_pad * osz)),      # output
    )(hits, emb_p, w_p, invn_p, label_p)

    return out_pad[:nB, :C]


def _arcface2_reference(embeddings, weight, label, *, s=64.0, m=0.5):
    """Pure-JAX reference mirroring the PyTorch forward."""
    cos_m = math.cos(m)
    sin_m = math.sin(m)
    mm = sin_m * m
    threshold = math.cos(math.pi - m)

    kernel_norm = weight / jnp.linalg.norm(weight, axis=0, keepdims=True)
    cos_theta = jnp.clip(embeddings @ kernel_norm, -1.0, 1.0)
    sin_theta = jnp.sqrt(1.0 - cos_theta ** 2)
    cos_theta_m = cos_theta * cos_m - sin_theta * sin_m
    keep_val = cos_theta - mm
    cos_theta_m = jnp.where((cos_theta - threshold) <= 0.0, keep_val, cos_theta_m)
    nB, C = cos_theta.shape
    label_mask = jax.nn.one_hot(label, C, dtype=bool)
    out = jnp.where(label_mask, cos_theta_m, cos_theta)
    return out * s


if __name__ == "__main__":
    # Small, forward-consistent shapes: nB=8, embedding_size=64, classnum=512.
    nB, E, C = 8, 64, 512
    key = jax.random.PRNGKey(0)
    k_emb, k_w, k_lab = jax.random.split(key, 3)

    # Embeddings are typically L2-normalized upstream of ArcFace.
    embeddings = jax.random.normal(k_emb, (nB, E), dtype=jnp.float32)
    embeddings = embeddings / jnp.linalg.norm(embeddings, axis=1, keepdims=True)

    weight = jax.random.uniform(k_w, (E, C), dtype=jnp.float32,
                                minval=-1.0, maxval=1.0)
    label = jax.random.randint(k_lab, (nB,), 0, C, dtype=jnp.int32)

    ref = _arcface2_reference(embeddings, weight, label, s=64.0, m=0.5)

    # Exact f32 MXU path — checked tightly against the f32 reference.
    out_f32 = jax.block_until_ready(
        arcface2_forward(embeddings, weight, label, s=64.0, m=0.5,
                         mxu_dtype=jnp.float32))
    assert out_f32.shape == (nB, C)
    assert jnp.allclose(out_f32, ref, rtol=1e-3, atol=1e-2), "f32 mismatch"

    # Default bf16-input / f32-accumulate / f32-normalization path — checked
    # loosely against the f32 reference (only the MXU inputs are quantized).
    out_bf16 = jax.block_until_ready(
        arcface2_forward(embeddings, weight, label, s=64.0, m=0.5))
    assert out_bf16.shape == (nB, C)
    assert jnp.allclose(out_bf16, ref, rtol=2e-2, atol=0.5), "bf16 mismatch"

    print("KERNEL_OK")
</pallas_src>

<mosaic_0001>
module attributes {stable_mosaic.version = 11 : i64} {
  func.func @_arcface_kernel(%arg0: i32, %arg1: i32, %arg2: memref<2xi32, #tpu.memory_space<smem>>, %arg3: memref<8x128xf32, #tpu.memory_space<vmem>>, %arg4: memref<128x256xf32, #tpu.memory_space<vmem>>, %arg5: memref<1x256xf32, #tpu.memory_space<vmem>>, %arg6: memref<8x1xi32, #tpu.memory_space<vmem>>, %arg7: memref<8x256xf32, #tpu.memory_space<vmem>>) attributes {dimension_semantics = [#tpu.dimension_semantics<parallel>, #tpu.dimension_semantics<parallel>], iteration_bounds = array<i64: 1, 2>, scalar_prefetch = 1 : i64, scratch_operands = 0 : i64, tpu.core_type = #tpu.core_type<tc>, window_params = [{transform_indices = @transform_0, window_bounds = array<i64: 8, 128>}, {transform_indices = @transform_1, window_bounds = array<i64: 128, 256>}, {transform_indices = @transform_2, window_bounds = array<i64: 1, 256>}, {transform_indices = @transform_3, window_bounds = array<i64: 8, 1>}, {transform_indices = @transform_4, window_bounds = array<i64: 8, 256>}]} {
    %c0 = arith.constant 0 : index
    %c0_0 = arith.constant 0 : index
    %0 = vector.load %arg3[%c0, %c0_0] : memref<8x128xf32, #tpu.memory_space<vmem>>, vector<8x128xf32>
    %c0_1 = arith.constant 0 : index
    %c0_2 = arith.constant 0 : index
    %1 = vector.load %arg4[%c0_1, %c0_2] : memref<128x256xf32, #tpu.memory_space<vmem>>, vector<128x256xf32>
    %cst = arith.constant dense<0.000000e+00> : vector<8x256xf32>
    %2 = tpu.matmul %0, %1, %cst {dimension_numbers = #tpu.dot_dimension_numbers<[1], [0], [0], [1], [0, 0, 1, 1], [], []>} : vector<8x128xf32>, vector<128x256xf32>, vector<8x256xf32> -> vector<8x256xf32>
    %c0_3 = arith.constant 0 : index
    %c0_4 = arith.constant 0 : index
    %3 = vector.load %arg5[%c0_3, %c0_4] : memref<1x256xf32, #tpu.memory_space<vmem>>, vector<1x256xf32>
    %4 = vector.broadcast %3 : vector<1x256xf32> to vector<8x256xf32>
    %5 = arith.mulf %2, %4 : vector<8x256xf32>
    %cst_5 = arith.constant -6.400000e+01 : f32
    %cst_6 = arith.constant 6.400000e+01 : f32
    %6 = vector.broadcast %cst_5 : f32 to vector<8x256xf32>
    %7 = arith.maximumf %6, %5 : vector<8x256xf32>
    %8 = vector.broadcast %cst_6 : f32 to vector<8x256xf32>
    %9 = arith.minimumf %8, %7 : vector<8x256xf32>
    %c0_7 = arith.constant 0 : index
    %c0_8 = arith.constant 0 : index
    %10 = vector.load %arg7[%c0_7, %c0_8] : memref<8x256xf32, #tpu.memory_space<vmem>>, vector<8x256xf32>
    tpu.vector_store %arg7[%c0_7, %c0_8], %9 {strides = array<i32>} : memref<8x256xf32, #tpu.memory_space<vmem>>, vector<8x256xf32>,
    %c256_i32 = arith.constant 256 : i32
    %11 = arith.muli %arg1, %c256_i32 : i32
    %c2_i32 = arith.constant 2 : i32
    %12 = arith.muli %arg0, %c2_i32 : i32
    %13 = arith.addi %12, %arg1 : i32
    %14 = arith.index_cast %13 : i32 to index
    %15 = memref.load %arg2[%14] : memref<2xi32, #tpu.memory_space<smem>>
    %c0_i32 = arith.constant 0 : i32
    %16 = arith.cmpi sgt, %15, %c0_i32 : i32
    %17 = arith.extui %16 : i1 to i32
    %c0_i32_9 = arith.constant 0 : i32
    %18 = arith.cmpi ne, %17, %c0_i32_9 : i32
    scf.if %18 {
      %cst_10 = arith.constant 1.562500e-02 : f32
      %19 = vector.broadcast %cst_10 : f32 to vector<8x256xf32>
      %20 = arith.mulf %9, %19 : vector<8x256xf32>
      %21 = arith.mulf %20, %20 : vector<8x256xf32>
      %cst_11 = arith.constant 1.000000e+00 : f32
      %22 = vector.broadcast %cst_11 : f32 to vector<8x256xf32>
      %23 = arith.subf %22, %21 : vector<8x256xf32>
      %cst_12 = arith.constant 0.000000e+00 : f32
      %24 = vector.broadcast %cst_12 : f32 to vector<8x256xf32>
      %25 = arith.maximumf %23, %24 : vector<8x256xf32>
      %26 = math.sqrt %25 : vector<8x256xf32>
      %cst_13 = arith.constant 0.87758255 : f32
      %27 = vector.broadcast %cst_13 : f32 to vector<8x256xf32>
      %28 = arith.mulf %20, %27 : vector<8x256xf32>
      %cst_14 = arith.constant 0.47942555 : f32
      %29 = vector.broadcast %cst_14 : f32 to vector<8x256xf32>
      %30 = arith.mulf %26, %29 : vector<8x256xf32>
      %31 = arith.subf %28, %30 : vector<8x256xf32>
      %cst_15 = arith.constant -0.87758255 : f32
      %32 = vector.broadcast %cst_15 : f32 to vector<8x256xf32>
      %33 = arith.subf %20, %32 : vector<8x256xf32>
      %cst_16 = arith.constant 0.000000e+00 : f32
      %34 = vector.broadcast %cst_16 : f32 to vector<8x256xf32>
      %35 = arith.cmpf ole, %33, %34 : vector<8x256xf32>
      %cst_17 = arith.constant 0.239712775 : f32
      %36 = vector.broadcast %cst_17 : f32 to vector<8x256xf32>
      %37 = arith.subf %20, %36 : vector<8x256xf32>
      %38 = arith.select %35, %37, %31 : vector<8x256xi1>, vector<8x256xf32>
      %39 = tpu.iota {dimensions = array<i32: 1>} : vector<8x256xi32>
      %40 = vector.broadcast %11 : i32 to vector<8x256xi32>
      %41 = arith.addi %39, %40 : vector<8x256xi32>
      %c0_18 = arith.constant 0 : index
      %c0_19 = arith.constant 0 : index
      %42 = vector.load %arg6[%c0_18, %c0_19] : memref<8x1xi32, #tpu.memory_space<vmem>>, vector<8x1xi32>
      %43 = vector.broadcast %42 : vector<8x1xi32> to vector<8x256xi32>
      %44 = arith.cmpi eq, %41, %43 : vector<8x256xi32>
      %cst_20 = arith.constant 6.400000e+01 : f32
      %45 = vector.broadcast %cst_20 : f32 to vector<8x256xf32>
      %46 = arith.mulf %38, %45 : vector<8x256xf32>
      %47 = arith.select %44, %46, %9 : vector<8x256xi1>, vector<8x256xf32>
      %c0_21 = arith.constant 0 : index
      %c0_22 = arith.constant 0 : index
      %48 = vector.load %arg7[%c0_21, %c0_22] : memref<8x256xf32, #tpu.memory_space<vmem>>, vector<8x256xf32>
      tpu.vector_store %arg7[%c0_21, %c0_22], %47 {strides = array<i32>} : memref<8x256xf32, #tpu.memory_space<vmem>>, vector<8x256xf32>,
    } else {
    }
    return
  }
  func.func @transform_0(%arg0: i32, %arg1: i32, %arg2: memref<2xi32, #tpu.memory_space<smem>>) -> (i32, i32) {
    %c0_i32 = arith.constant 0 : i32
    %c0_i32_0 = arith.constant 0 : i32
    return %arg0, %c0_i32 : i32, i32
  }
  func.func @transform_1(%arg0: i32, %arg1: i32, %arg2: memref<2xi32, #tpu.memory_space<smem>>) -> (i32, i32) {
    %c0_i32 = arith.constant 0 : i32
    %c0_i32_0 = arith.constant 0 : i32
    return %c0_i32, %arg1 : i32, i32
  }
  func.func @transform_2(%arg0: i32, %arg1: i32, %arg2: memref<2xi32, #tpu.memory_space<smem>>) -> (i32, i32) {
    %c0_i32 = arith.constant 0 : i32
    %c0_i32_0 = arith.constant 0 : i32
    return %c0_i32, %arg1 : i32, i32
  }
  func.func @transform_3(%arg0: i32, %arg1: i32, %arg2: memref<2xi32, #tpu.memory_space<smem>>) -> (i32, i32) {
    %c0_i32 = arith.constant 0 : i32
    %c0_i32_0 = arith.constant 0 : i32
    return %arg0, %c0_i32 : i32, i32
  }
  func.func @transform_4(%arg0: i32, %arg1: i32, %arg2: memref<2xi32, #tpu.memory_space<smem>>) -> (i32, i32) {
    %c0_i32 = arith.constant 0 : i32
    return %arg0, %arg1 : i32, i32
  }
}

</mosaic_0001>

<llo_original>
// kernel: tpu_custom_call.1
$region0: #{tpu_custom_call.1}
  #allocation0 [shape = 'u32[]', space=smem, size = 0x4, offset = 0x4, fixed_abs, tag = 'smem constant byte address 0x4 - core index']
  #allocation1 [shape = 'u32[144,128]{1,0:T(1,128)}', space=vmem, size = 0x12000, scoped, tag = 'internal scratch']
  #allocation2 [shape = 's32[1]{0}', space=sflag, size = 0x4, scoped, tag = 'scoped memory for tpu_custom_call.1']
  #allocation3 [shape = 'u8[512]{0}', space=smem, size = 0x200, scoped, tag = 'prefetched SMEM operand 0']
  %s0 = inlined_call_operand.hbm [shape: s32[2], index: 0, kind: input, shape index: {}]
  %s1 = inlined_call_operand.vmem [shape: f32[8,128], index: 1, kind: input, shape index: {}]
  %s2 = inlined_call_operand.hbm [shape: f32[128,512], index: 2, kind: input, shape index: {}]
  %s3 = inlined_call_operand.vmem [shape: f32[1,512], index: 3, kind: input, shape index: {}]
  %s4 = inlined_call_operand.vmem [shape: s32[8,1], index: 4, kind: input, shape index: {}]
  %s5 = inlined_call_operand.hbm [shape: f32[8,512], index: 5, kind: output, shape index: {}]
  %s6 = sld [smem:[#allocation0]]
  $region57: #{tpu_custom_call.1} parent=0
    _
  %s8 = ssub.s32 1, %s6
  %s9 = scalar_select 0, %s8, %s6
  %11 = dma.hbm_to_smem %s0, 16, [#allocation3], [#allocation2]
  %12 = dma.done [#allocation2], 16
  %13 = sfence
  $region1: #{tpu_custom_call.1} parent=0
    #allocation4 [shape = 'u8[262144]{0}', space=vmem, size = 0x40000, scoped, tag = 'input window, operand 2']
    #allocation5 [shape = 's32[2]{0}', space=sflag, size = 0x8, scoped, tag = 'scoped memory for tpu_custom_call.1']
    #allocation6 [shape = 's32[2]{0}', space=sflag, size = 0x8, scoped, tag = 'scoped memory for tpu_custom_call.1']
    #allocation7 [shape = 'u8[16384]{0}', space=vmem, size = 0x4000, scoped, tag = 'output window, operand 0']
    %14 = vsyncpa [#allocation5], 0
    %s15 = scalar_lea.sflag [#allocation5], 1
    %16 = vsyncpa %s15, 0
    %17 = vsyncpa [#allocation6], 0
    %s18 = scalar_lea.sflag [#allocation6], 1
    %19 = vsyncpa %s18, 0
    loop: start=0, step=1, limit=4
    $region2: #{tpu_custom_call.1} parent=1 // loop_pre_header
      _
    $region3: #{tpu_custom_call.1} parent=1 // loop_header
      %s21 = sphi 0, %s25
      %p22 = scmp.ge.s32.totalorder %s21, 4
      %s28 = sphi 0, %s40
      %s29 = sphi 0, %s36
      %s30 = sphi 0, %s28
      %s31 = sphi 0, %s29
      %s32 = sphi 0, %s30
      %s33 = sphi 0, %s31
      %s43 = sphi 0, %s45
      %s46 = sphi 0, %s43
      %s47 = sphi 0, %s46
      %s63 = sphi 0, %s47
      %s69 = sphi 0, %s71
      %s72 = sphi 0, %s69
      %s73 = sphi 0, %s72
      %s89 = sphi 0, %s73
      %s95 = sphi 0, %s97
      %s98 = sphi 0, %s95
      %s99 = sphi 0, %s98
      %s115 = sphi 0, %s99
      %s121 = sphi 0, %s123
      %s124 = sphi 0, %s121
      %s125 = sphi 0, %s124
      %s141 = sphi 0, %s125
      %s149 = sphi 0, %s151
      %s152 = sphi 0, %s149
      %s153 = sphi 0, %s152
      %s169 = sphi 0, %s153
    $region4: #{tpu_custom_call.1} parent=1 // loop_header_branch
      %24 = sbr.rel (%p22) target = $region8
    $region5: #{tpu_custom_call.1} parent=1 // loop_body
      %s26 = ssub.s32 %s21, 1
      %s27 = ssub.s32 %s21, 2
      %s34 = sadd.s32 1, %s29
      %p35 = scmp.ge.s32.totalorder %s34, 2
      %s36 = scalar_select %p35, 0, %s34
      %s37 = sadd.s32 1, %s28
      %s38 = scalar_select %p35, %s37, %s28
      %p39 = scmp.ge.s32.totalorder %s38, 1
      %s40 = scalar_select %p39, 0, %s38
      %s41 = ssub.s32 %s28, %s40
      %p42 = scmp.eq.s32.totalorder %s41, 0
      %s44 = sadd.s32 %s43, 1
      %s45 = scalar_select %p42, %s43, %s44
      %p48 = pneg %p42
      %p49 = scmp.eq.s32.totalorder %s21, 1
      %p50 = por %p48, %p49
      %p51 = scmp.ne.s32.totalorder %s43, %s46
      %p52 = scmp.eq.s32.totalorder %s21, 0
      %p53 = por %p51, %p52
      %p54 = scmp.ne.s32.totalorder %s43, %s46
      %p55 = scmp.eq.s32.totalorder %s26, 1
      %p56 = por %p54, %p55
      %p57 = scmp.ne.s32.totalorder %s46, %s47
      %p58 = scmp.eq.s32.totalorder %s26, 0
      %p59 = por %p57, %p58
      %p60 = scmp.ne.s32.totalorder %s46, %s47
      %p61 = scmp.eq.s32.totalorder %s27, 1
      %p62 = por %p60, %p61
      %p64 = scmp.ne.s32.totalorder %s47, %s63
      %p65 = scmp.eq.s32.totalorder %s27, 0
      %p66 = por %p64, %p65
      %s67 = ssub.s32 %s29, %s36
      %p68 = scmp.eq.s32.totalorder %s67, 0
      %s70 = sadd.s32 %s69, 1
      %s71 = scalar_select %p68, %s69, %s70
      %p74 = pneg %p68
      %p75 = scmp.eq.s32.totalorder %s21, 1
      %p76 = por %p74, %p75
      %p77 = scmp.ne.s32.totalorder %s69, %s72
      %p78 = scmp.eq.s32.totalorder %s21, 0
      %p79 = por %p77, %p78
      %p80 = scmp.ne.s32.totalorder %s69, %s72
      %p81 = scmp.eq.s32.totalorder %s26, 1
      %p82 = por %p80, %p81
      %p83 = scmp.ne.s32.totalorder %s72, %s73
      %p84 = scmp.eq.s32.totalorder %s26, 0
      %p85 = por %p83, %p84
      %p86 = scmp.ne.s32.totalorder %s72, %s73
      %p87 = scmp.eq.s32.totalorder %s27, 1
      %p88 = por %p86, %p87
      %p90 = scmp.ne.s32.totalorder %s73, %s89
      %p91 = scmp.eq.s32.totalorder %s27, 0
      %p92 = por %p90, %p91
      %s93 = ssub.s32 %s29, %s36
      %p94 = scmp.eq.s32.totalorder %s93, 0
      %s96 = sadd.s32 %s95, 1
      %s97 = scalar_select %p94, %s95, %s96
      %p100 = pneg %p94
      %p101 = scmp.eq.s32.totalorder %s21, 1
      %p102 = por %p100, %p101
      %p103 = scmp.ne.s32.totalorder %s95, %s98
      %p104 = scmp.eq.s32.totalorder %s21, 0
      %p105 = por %p103, %p104
      %p106 = scmp.ne.s32.totalorder %s95, %s98
      %p107 = scmp.eq.s32.totalorder %s26, 1
      %p108 = por %p106, %p107
      %p109 = scmp.ne.s32.totalorder %s98, %s99
      %p110 = scmp.eq.s32.totalorder %s26, 0
      %p111 = por %p109, %p110
      %p112 = scmp.ne.s32.totalorder %s98, %s99
      %p113 = scmp.eq.s32.totalorder %s27, 1
      %p114 = por %p112, %p113
      %p116 = scmp.ne.s32.totalorder %s99, %s115
      %p117 = scmp.eq.s32.totalorder %s27, 0
      %p118 = por %p116, %p117
      %s119 = ssub.s32 %s28, %s40
      %p120 = scmp.eq.s32.totalorder %s119, 0
      %s122 = sadd.s32 %s121, 1
      %s123 = scalar_select %p120, %s121, %s122
      %p126 = pneg %p120
      %p127 = scmp.eq.s32.totalorder %s21, 1
      %p128 = por %p126, %p127
      %p129 = scmp.ne.s32.totalorder %s121, %s124
      %p130 = scmp.eq.s32.totalorder %s21, 0
      %p131 = por %p129, %p130
      %p132 = scmp.ne.s32.totalorder %s121, %s124
      %p133 = scmp.eq.s32.totalorder %s26, 1
      %p134 = por %p132, %p133
      %p135 = scmp.ne.s32.totalorder %s124, %s125
      %p136 = scmp.eq.s32.totalorder %s26, 0
      %p137 = por %p135, %p136
      %p138 = scmp.ne.s32.totalorder %s124, %s125
      %p139 = scmp.eq.s32.totalorder %s27, 1
      %p140 = por %p138, %p139
      %p142 = scmp.ne.s32.totalorder %s125, %s141
      %p143 = scmp.eq.s32.totalorder %s27, 0
      %p144 = por %p142, %p143
      %s145 = ssub.s32 %s28, %s40
      %s146 = ssub.s32 %s29, %s36
      %s147 = sor.u32 %s145, %s146
      %p148 = scmp.eq.s32.totalorder %s147, 0
      %s150 = sadd.s32 %s149, 1
      %s151 = scalar_select %p148, %s149, %s150
      %p154 = pneg %p148
      %p155 = scmp.eq.s32.totalorder %s21, 1
      %p156 = por %p154, %p155
      %p157 = scmp.ne.s32.totalorder %s149, %s152
      %p158 = scmp.eq.s32.totalorder %s21, 0
      %p159 = por %p157, %p158
      %p160 = scmp.ne.s32.totalorder %s149, %s152
      %p161 = scmp.eq.s32.totalorder %s26, 1
      %p162 = por %p160, %p161
      %p163 = scmp.ne.s32.totalorder %s152, %s153
      %p164 = scmp.eq.s32.totalorder %s26, 0
      %p165 = por %p163, %p164
      %p166 = scmp.ne.s32.totalorder %s152, %s153
      %p167 = scmp.eq.s32.totalorder %s27, 1
      %p168 = por %p166, %p167
      %p170 = scmp.ne.s32.totalorder %s153, %s169
      %p171 = scmp.eq.s32.totalorder %s27, 0
      %p172 = por %p170, %p171
      %p173 = scmp.le.s32.totalorder 1, %s21
      %p174 = scmp.lt.s32.totalorder %s21, 3
      %p175 = pnand %p173, %p174
      %p176 = pneg %p175
      // Predicated region
      $region9: #{tpu_custom_call.1} parent=5 // pred_check
        _
      $region10: #{tpu_custom_call.1} parent=5 // pred_check_branch
        %178 = sbr.rel (%p175) target = $region12
      $region11: #{tpu_custom_call.1} parent=5 // pred_region
        %s179 = ssub.s32 %s21, 1
        // Predicated region
        $region13: #{tpu_custom_call.1} parent=11 // pred_check
          %p180 = pneg %p59
        $region14: #{tpu_custom_call.1} parent=11 // pred_check_branch
          %182 = sbr.rel (%p180) target = $region16
        $region15: #{tpu_custom_call.1} parent=11 // pred_region
          %p183 = scmp.lt.s32.totalorder %s30, 0
          %s184 = scalar_select %p183, %s30, 0
          %s185 = smul.addr %s184, 8
          %s186 = scalar_lea.vmem %s1, %s185
        $region16: #{tpu_custom_call.1} parent=11 // pred_fallthru
          _
        // Predicated region
        $region17: #{tpu_custom_call.1} parent=11 // pred_check
          %p187 = pneg %p137
        $region18: #{tpu_custom_call.1} parent=11 // pred_check_branch
          %189 = sbr.rel (%p187) target = $region20
        $region19: #{tpu_custom_call.1} parent=11 // pred_region
          %p190 = scmp.lt.s32.totalorder %s30, 0
          %s191 = scalar_select %p190, %s30, 0
          %s192 = smul.addr %s191, 8
          %s193 = scalar_lea.vmem %s4, %s192
        $region20: #{tpu_custom_call.1} parent=11 // pred_fallthru
          _
      $region12: #{tpu_custom_call.1} parent=5 // pred_fallthru
        _
      %p194 = scmp.lt.s32.totalorder %s21, 2
      // Predicated region
      $region21: #{tpu_custom_call.1} parent=5 // pred_check
        %p195 = pneg %p194
      $region22: #{tpu_custom_call.1} parent=5 // pred_check_branch
        %197 = sbr.rel (%p195) target = $region24
      $region23: #{tpu_custom_call.1} parent=5 // pred_region
        // Predicated region
        $region25: #{tpu_custom_call.1} parent=23 // pred_check
          %p198 = pneg %p79
        $region26: #{tpu_custom_call.1} parent=23 // pred_check_branch
          %200 = sbr.rel (%p198) target = $region28
        $region27: #{tpu_custom_call.1} parent=23 // pred_region
          %s201 = sand.u32 %s69, 1
          %s202 = scalar_lea.sflag [#allocation5], %s201
          %s203 = sand.u32 %s69, 1
          %s204 = smul.addr %s203, 256
          %s205 = scalar_lea.vmem [#allocation4], %s204
          %s206 = smul.u32 2, %s29
          %s208 = ssub.s32 4096, 4096
          %209 = vsyncadd %s202, %s208
          %s210 = smul.addr %s206, 128
          %s211 = scalar_lea.hbm %s2, %s210
          %s212 = sshll.u32 %s205, 4
          %s213 = int_to_ptr.vmem [resolvable:$true] %s212
          %218 = dma.hbm_to_vmem [thread:$0]  %s211, 4096, %s213, %s202, 512, 256, 16
        $region28: #{tpu_custom_call.1} parent=23 // pred_fallthru
          _
        // Predicated region
        $region29: #{tpu_custom_call.1} parent=23 // pred_check
          %p219 = pneg %p105
        $region30: #{tpu_custom_call.1} parent=23 // pred_check_branch
          %221 = sbr.rel (%p219) target = $region32
        $region31: #{tpu_custom_call.1} parent=23 // pred_region
          %s222 = smul.u32 2, %s29
          %p223 = scmp.lt.s32.totalorder %s222, 3
          %s224 = scalar_select %p223, %s222, 3
          %s225 = scalar_lea.vmem %s3, %s224
          %s226 = smul.u32 2, %s29
        $region32: #{tpu_custom_call.1} parent=23 // pred_fallthru
          _
      $region24: #{tpu_custom_call.1} parent=5 // pred_fallthru
        _
      %p227 = scmp.le.s32.totalorder 1, %s21
      %p228 = scmp.lt.s32.totalorder %s21, 3
      %p229 = pnand %p227, %p228
      %p230 = pneg %p229
      // Predicated region
      $region33: #{tpu_custom_call.1} parent=5 // pred_check
        _
      $region34: #{tpu_custom_call.1} parent=5 // pred_check_branch
        %232 = sbr.rel (%p229) target = $region36
      $region35: #{tpu_custom_call.1} parent=5 // pred_region
        %s233 = ssub.s32 %s21, 1
        %s234 = sand.u32 %s72, 1
        %s235 = scalar_lea.sflag [#allocation5], %s234
        %s236 = sand.u32 %s72, 1
        %s237 = smul.addr %s236, 256
        %s238 = scalar_lea.vmem [#allocation4], %s237
        // Predicated region
        $region37: #{tpu_custom_call.1} parent=35 // pred_check
          %p239 = pneg %p85
        $region38: #{tpu_custom_call.1} parent=35 // pred_check_branch
          %241 = sbr.rel (%p239) target = $region40
        $region39: #{tpu_custom_call.1} parent=35 // pred_region
          %242 = dma.done %s235, 4096
        $region40: #{tpu_custom_call.1} parent=35 // pred_fallthru
          _
        %p243 = scmp.lt.s32.totalorder %s30, 0
        %s244 = scalar_select %p243, %s30, 0
        %s245 = smul.addr %s244, 8
        %s246 = scalar_lea.vmem %s1, %s245
        %p247 = pneg %p59
        %p248 = pneg %p56
        %s249 = sand.u32 %s72, 1
        %s250 = scalar_lea.sflag [#allocation5], %s249
        %s251 = sand.u32 %s72, 1
        %s252 = smul.addr %s251, 256
        %s253 = scalar_lea.vmem [#allocation4], %s252
        %p254 = pneg %p85
        %p255 = pneg %p82
        %s256 = smul.u32 2, %s31
        %p257 = scmp.lt.s32.totalorder %s256, 3
        %s258 = scalar_select %p257, %s256, 3
        %s259 = scalar_lea.vmem %s3, %s258
        %p260 = pneg %p111
        %p261 = pneg %p108
        %p262 = scmp.lt.s32.totalorder %s30, 0
        %s263 = scalar_select %p262, %s30, 0
        %s264 = smul.addr %s263, 8
        %s265 = scalar_lea.vmem %s4, %s264
        %p266 = pneg %p137
        %p267 = pneg %p134
        %p268 = pneg %p165
        %p269 = pneg %p162
        %s270 = sand.u32 %s152, 1
        %s271 = scalar_lea.sflag [#allocation6], %s270
        %s272 = sand.u32 %s152, 1
        %s273 = smul.addr %s272, 16
        %s274 = scalar_lea.vmem [#allocation7], %s273
        %p275 = scmp.lt.s32.totalorder %s30, 0
        %s276 = scalar_select %p275, %s30, 0
        %s277 = smul.addr %s276, 8
        %s278 = scalar_lea.vmem %s1, %s277
        %s279 = smul.u32 2, %s31
        %s280 = smul.u32 2, %s31
        %p281 = scmp.lt.s32.totalorder %s280, 3
        %s282 = scalar_select %p281, %s280, 3
        %s283 = scalar_lea.vmem %s3, %s282
        %s284 = smul.u32 2, %s31
        %p285 = scmp.lt.s32.totalorder %s30, 0
        %s286 = scalar_select %p285, %s30, 0
        %s287 = smul.addr %s286, 8
        %s288 = scalar_lea.vmem %s4, %s287
        %s289 = smul.u32 2, %s31
        %v290 = vld [vmem:[%s278] sm:$0xff]
        %v291 = vld [vmem:[%s238] sm:$0xff]
        %v292 = vld [vmem:[%s238 + $0x8] sm:$0xff]
        %v293 = vld [vmem:[%s238 + $0x10] sm:$0xff]
        %v294 = vld [vmem:[%s238 + $0x18] sm:$0xff]
        %v295 = vld [vmem:[%s238 + $0x20] sm:$0xff]
        %v296 = vld [vmem:[%s238 + $0x28] sm:$0xff]
        %v297 = vld [vmem:[%s238 + $0x30] sm:$0xff]
        %v298 = vld [vmem:[%s238 + $0x38] sm:$0xff]
        %v299 = vld [vmem:[%s238 + $0x40] sm:$0xff]
        %v300 = vld [vmem:[%s238 + $0x48] sm:$0xff]
        %v301 = vld [vmem:[%s238 + $0x50] sm:$0xff]
        %v302 = vld [vmem:[%s238 + $0x58] sm:$0xff]
        %v303 = vld [vmem:[%s238 + $0x60] sm:$0xff]
        %v304 = vld [vmem:[%s238 + $0x68] sm:$0xff]
        %v305 = vld [vmem:[%s238 + $0x70] sm:$0xff]
        %v306 = vld [vmem:[%s238 + $0x78] sm:$0xff]
        %v307 = vld [vmem:[%s238 + $0x80] sm:$0xff]
        %v308 = vld [vmem:[%s238 + $0x88] sm:$0xff]
        %v309 = vld [vmem:[%s238 + $0x90] sm:$0xff]
        %v310 = vld [vmem:[%s238 + $0x98] sm:$0xff]
        %v311 = vld [vmem:[%s238 + $0xa0] sm:$0xff]
        %v312 = vld [vmem:[%s238 + $0xa8] sm:$0xff]
        %v313 = vld [vmem:[%s238 + $0xb0] sm:$0xff]
        %v314 = vld [vmem:[%s238 + $0xb8] sm:$0xff]
        %v315 = vld [vmem:[%s238 + $0xc0] sm:$0xff]
        %v316 = vld [vmem:[%s238 + $0xc8] sm:$0xff]
        %v317 = vld [vmem:[%s238 + $0xd0] sm:$0xff]
        %v318 = vld [vmem:[%s238 + $0xd8] sm:$0xff]
        %v319 = vld [vmem:[%s238 + $0xe0] sm:$0xff]
        %v320 = vld [vmem:[%s238 + $0xe8] sm:$0xff]
        %v321 = vld [vmem:[%s238 + $0xf0] sm:$0xff]
        %v322 = vld [vmem:[%s238 + $0xf8] sm:$0xff]
        %323 = vmatprep.subr.mxu0 %v292
        %324 = vmatpush1.msra.mxu0 %v291
        %325 = vmatprep.subr.mxu0 %v294
        %326 = vmatpush1.msra.mxu0 %v293
        %327 = vmatprep.subr.mxu0 %v296
        %328 = vmatpush1.msra.mxu0 %v295
        %329 = vmatprep.subr.mxu0 %v298
        %330 = vmatpush1.msra.mxu0 %v297
        %331 = vmatprep.subr.mxu0 %v300
        %332 = vmatpush1.msra.mxu0 %v299
        %333 = vmatprep.subr.mxu0 %v302
        %334 = vmatpush1.msra.mxu0 %v301
        %335 = vmatprep.subr.mxu0 %v304
        %336 = vmatpush1.msra.mxu0 %v303
        %337 = vmatprep.subr.mxu0 %v306
        %338 = vmatpush1.msra.mxu0 %v305
        %339 = vmatprep.subr.mxu0 %v308
        %340 = vmatpush1.msra.mxu0 %v307
        %341 = vmatprep.subr.mxu0 %v310
        %342 = vmatpush1.msra.mxu0 %v309
        %343 = vmatprep.subr.mxu0 %v312
        %344 = vmatpush1.msra.mxu0 %v311
        %345 = vmatprep.subr.mxu0 %v314
        %346 = vmatpush1.msra.mxu0 %v313
        %347 = vmatprep.subr.mxu0 %v316
        %348 = vmatpush1.msra.mxu0 %v315
        %349 = vmatprep.subr.mxu0 %v318
        %350 = vmatpush1.msra.mxu0 %v317
        %351 = vmatprep.subr.mxu0 %v320
        %352 = vmatpush1.msra.mxu0 %v319
        %353 = vmatprep.subr.mxu0 %v322
        %354 = vmatpush1.msra.mxu0 %v321
        %355 = vmatprep.subr.mxu0 0.0
        %356 = vmatpush1.msra.mxu0 0.0
        %357 = vmatprep.subr.mxu0 0.0
        %358 = vmatpush1.msra.mxu0 0.0
        %359 = vmatprep.subr.mxu0 0.0
        %360 = vmatpush1.msra.mxu0 0.0
        %361 = vmatprep.subr.mxu0 0.0
        %362 = vmatpush1.msra.mxu0 0.0
        %363 = vmatprep.subr.mxu0 0.0
        %364 = vmatpush1.msra.mxu0 0.0
        %365 = vmatprep.subr.mxu0 0.0
        %366 = vmatpush1.msra.mxu0 0.0
        %367 = vmatprep.subr.mxu0 0.0
        %368 = vmatpush1.msra.mxu0 0.0
        %369 = vmatprep.subr.mxu0 0.0
        %370 = vmatpush1.msra.mxu0 0.0
        %371 = vmatprep.subr.mxu0 0.0
        %372 = vmatpush1.msra.mxu0 0.0
        %373 = vmatprep.subr.mxu0 0.0
        %374 = vmatpush1.msra.mxu0 0.0
        %375 = vmatprep.subr.mxu0 0.0
        %376 = vmatpush1.msra.mxu0 0.0
        %377 = vmatprep.subr.mxu0 0.0
        %378 = vmatpush1.msra.mxu0 0.0
        %379 = vmatprep.subr.mxu0 0.0
        %380 = vmatpush1.msra.mxu0 0.0
        %381 = vmatprep.subr.mxu0 0.0
        %382 = vmatpush1.msra.mxu0 0.0
        %383 = vmatprep.subr.mxu0 0.0
        %384 = vmatpush1.msra.mxu0 0.0
        %385 = vmatprep.subr.mxu0 0.0
        %386 = vmatpush1.msra.mxu0 0.0
        %387 = vmatprep.mubr.f32.mxu0 0.0
        %388 = vmatmul.mubr.f32.gmra.mrb[0].mxu0 %v290
        %v389 = vpop.f32.mrb[0].mxu0
        %v390 = vadd.f32 0.0, %v389
        %v391 = vpop.f32.mrb[0].mxu0
        %v392 = vadd.f32 0.0, %v391
        %393 = vdwg.mxu0
        %v394 = vld [vmem:[%s283] sm:$0x3]
        %v396 = vlaneseq
        %v397 = vshrl.u32 %v396, 7
        %v398 = vsub.s32 0, %v397
        %v399 = vrot.slane %v394, %v398
        %v400 = vlaneseq
        %v401 = vshrl.u32 %v400, 7
        %v402 = vsub.s32 1, %v401
        %v403 = vrot.slane %v394, %v402
        %v406 = vmul.f32 %v390, %v399
        %v407 = vmul.f32 %v392, %v403
        %v408 = vmax.f32 %v406, -64.0
        %v409 = vmax.f32 %v407, -64.0
        %v410 = vmin.f32 %v408, 64.0
        %v411 = vmin.f32 %v409, 64.0
        %412 = vst [vmem:[%s274] sm:$0xff] %v410
        %413 = vst [vmem:[%s274 + $0x8] sm:$0xff] %v411
        %s414 = smul.u32 %s31, 256
        %s415 = smul.u32 %s30, 2
        %s416 = sadd.s32 %s415, %s31
        %s417 = sld [smem:[#allocation3 + %s416]]
        %p418 = scmp.gt.s32.totalorder %s417, 0
        // Predicated region
        $region41: #{tpu_custom_call.1} parent=35 // pred_check
          %p419 = pneg %p418
        $region42: #{tpu_custom_call.1} parent=35 // pred_check_branch
          %421 = sbr.rel (%p419) target = $region44
        $region43: #{tpu_custom_call.1} parent=35 // pred_region
          %v422 = vmul.f32 %v410, 0.015625
          %v423 = vmul.f32 %v411, 0.015625
          %v424 = vmul.f32 %v422, %v422
          %v425 = vmul.f32 %v423, %v423
          %v426 = vsub.f32 1.0, %v424
          %v427 = vsub.f32 1.0, %v425
          %v428 = vmax.f32 %v426, 0.0
          %v429 = vmax.f32 %v427, 0.0
          %v430 = vrsqrt.pop %v428
          %v431 = vmul.f32 %v428, %v430
          %vm432 = vcmp.eq.f32.partialorder %v428, inf
          %v433 = vsel %vm432, %v428, %v431
          %vm434 = vcmp.eq.f32.partialorder %v428, 0.0
          %v435 = vand.u32 %v428, 2147483648
          %v436 = vsel %vm434, %v435, %v433
          %v437 = vrsqrt.pop %v429
          %v438 = vmul.f32 %v429, %v437
          %vm439 = vcmp.eq.f32.partialorder %v429, inf
          %v440 = vsel %vm439, %v429, %v438
          %vm441 = vcmp.eq.f32.partialorder %v429, 0.0
          %v442 = vand.u32 %v429, 2147483648
          %v443 = vsel %vm441, %v442, %v440
          %v444 = vmul.f32 %v422, 0.87758255
          %v445 = vmul.f32 %v423, 0.87758255
          %v446 = vmul.f32 %v436, 0.47942555
          %v447 = vmul.f32 %v443, 0.47942555
          %v448 = vsub.f32 %v444, %v446
          %v449 = vsub.f32 %v445, %v447
          %v450 = vsub.f32 %v422, -0.87758255
          %v451 = vsub.f32 %v423, -0.87758255
          %vm452 = vcmp.le.f32.partialorder %v450, 0.0
          %vm453 = vcmp.le.f32.partialorder %v451, 0.0
          %v454 = vsub.f32 %v422, 0.23971277
          %v455 = vsub.f32 %v423, 0.23971277
          %v456 = vsel %vm452, %v454, %v448
          %v457 = vsel %vm453, %v455, %v449
          %v458 = vlaneseq
          %v459 = vand.u32 %v458, 127
          %v460 = vadd.s32 %v459, 128
          %v461 = vstv %s414
          %v462 = vadd.s32 %v459, %v461
          %v463 = vadd.s32 %v460, %v461
          %v464 = vld [vmem:[%s288] sm:$0xff]
          %465 = vset.pattern.permute.xlu0 0
          %466 = vperm.xlu0 %465, %v464
          %v467 = vpop.permute.xlu0 %466
          %vm468 = vcmp.eq.s32.totalorder %v462, %v467
          %vm469 = vcmp.eq.s32.totalorder %v463, %v467
          %v470 = vmul.f32 %v456, 64.0
          %v471 = vmul.f32 %v457, 64.0
          %v472 = vsel %vm468, %v470, %v410
          %v473 = vsel %vm469, %v471, %v411
          %474 = vst [vmem:[%s274] sm:$0xff] %v472
          %475 = vst [vmem:[%s274 + $0x8] sm:$0xff] %v473
        $region44: #{tpu_custom_call.1} parent=35 // pred_fallthru
          _
        %s476 = sand.u32 %s152, 1
        %s477 = scalar_lea.sflag [#allocation6], %s476
        %s478 = sand.u32 %s152, 1
        %s479 = smul.addr %s478, 16
        %s480 = scalar_lea.vmem [#allocation7], %s479
        // Predicated region
        $region45: #{tpu_custom_call.1} parent=35 // pred_check
          %p481 = pneg %p162
        $region46: #{tpu_custom_call.1} parent=35 // pred_check_branch
          %483 = sbr.rel (%p481) target = $region48
        $region47: #{tpu_custom_call.1} parent=35 // pred_region
          %s484 = smul.u32 2, %s31
          %s486 = ssub.s32 256, 256
          %487 = vsyncadd %s477, %s486
          %s488 = smul.addr %s30, 4
          %s489 = sadd.s32 %s484, %s488
          %s490 = smul.addr %s489, 128
          %s491 = scalar_lea.hbm %s5, %s490
          %s493 = sshll.u32 %s480, 4
          %s494 = int_to_ptr.vmem [resolvable:$true] %s493
          %496 = dma.vmem_to_hbm [thread:$0]  %s494, 256, %s491, %s477
        $region48: #{tpu_custom_call.1} parent=35 // pred_fallthru
          _
      $region36: #{tpu_custom_call.1} parent=5 // pred_fallthru
        _
      %p497 = scmp.le.s32.totalorder 2, %s21
      // Predicated region
      $region49: #{tpu_custom_call.1} parent=5 // pred_check
        %p498 = pneg %p497
      $region50: #{tpu_custom_call.1} parent=5 // pred_check_branch
        %500 = sbr.rel (%p498) target = $region52
      $region51: #{tpu_custom_call.1} parent=5 // pred_region
        %s501 = ssub.s32 %s21, 2
        // Predicated region
        $region53: #{tpu_custom_call.1} parent=51 // pred_check
          %p502 = pneg %p168
        $region54: #{tpu_custom_call.1} parent=51 // pred_check_branch
          %504 = sbr.rel (%p502) target = $region56
        $region55: #{tpu_custom_call.1} parent=51 // pred_region
          %s505 = sand.u32 %s153, 1
          %s506 = scalar_lea.sflag [#allocation6], %s505
          %s507 = sand.u32 %s153, 1
          %s508 = smul.addr %s507, 16
          %s509 = scalar_lea.vmem [#allocation7], %s508
          %510 = dma.done %s506, 256
        $region56: #{tpu_custom_call.1} parent=51 // pred_fallthru
          _
      $region52: #{tpu_custom_call.1} parent=5 // pred_fallthru
        _
    $region6: #{tpu_custom_call.1} parent=1 // loop_footer
      %s25 = sadd.s32 1, %s21
    $region7: #{tpu_custom_call.1} parent=1 // loop_footer_branch
      %20 = sbr.rel target = $region3
    $region8: #{tpu_custom_call.1} parent=1 // loop_exit
      _
    %511 = vsyncpa [#allocation5], 1
    %s512 = scalar_lea.sflag [#allocation5], 1
    %513 = vsyncpa %s512, 1
    %514 = vsyncpa [#allocation6], 1
    %s515 = scalar_lea.sflag [#allocation6], 1
    %516 = vsyncpa %s515, 1

</llo_original>
